<compile_context>
chip_gen: v7x
topology: tpu7x:2x2x1
jax: 0.10.0
libtpu: 0.0.40
codegen_flags: <defaults>
</compile_context>

<pallas_src>
import functools

import jax
import jax.numpy as jnp
from jax.experimental import pallas as pl
from jax.experimental.pallas import tpu as pltpu

IN_FEATURES = 10
OUT_FEATURES = 10
LANE = 128       # TPU lane width: keep the last dim lane-dense
SUBLANE = 8      # f32 sublane packing
MAX_TB = 1024    # batch-tile cap: (1024,128) f32 = 0.5 MiB per buffer


def _round_up(n, m):
    return ((n + m - 1) // m) * m


def linear_kernel(x_ref, wt_ref, b_ref, o_ref):
    # x_ref : (TB, 128)   lane-padded activations (pipelined over batch)
    # wt_ref: (128, 128)  lane-padded W^T, resident across grid steps
    # b_ref : (1, 128)    lane-padded bias, resident across grid steps
    # o_ref : (TB, 128)   lane-dense output tile -> unmasked stores
    acc = jnp.dot(x_ref[...], wt_ref[...], preferred_element_type=jnp.float32)
    o_ref[...] = (acc + b_ref[...]).astype(o_ref.dtype)


def prepare_params(w, b):
    """One-time: transpose + zero-pad W ([out,in]) and b to lane-dense tiles."""
    wt_pad = jnp.zeros((LANE, LANE), dtype=w.dtype)
    wt_pad = wt_pad.at[:IN_FEATURES, :OUT_FEATURES].set(w.T)
    b_pad = jnp.zeros((1, LANE), dtype=b.dtype)
    b_pad = b_pad.at[0, :OUT_FEATURES].set(b)
    return wt_pad, b_pad


@functools.partial(jax.jit, static_argnames=("tb",))
def net_forward(x, wt_pad, b_pad, *, tb=None):
    """x: (B, 10) float32; wt_pad: (128, 128); b_pad: (1, 128). Returns (B, 10)."""
    B = x.shape[0]
    if tb is None:
        tb = min(MAX_TB, _round_up(B, SUBLANE))
    Bp = _round_up(B, tb)

    # Lane-pad activations to 128 and batch-pad to a multiple of the tile.
    xp = jnp.zeros((Bp, LANE), dtype=x.dtype)
    xp = xp.at[:B, :IN_FEATURES].set(x)

    out = pl.pallas_call(
        linear_kernel,
        out_shape=jax.ShapeDtypeStruct((Bp, LANE), x.dtype),
        grid_spec=pltpu.PrefetchScalarGridSpec(
            num_scalar_prefetch=0,
            grid=(Bp // tb,),
            in_specs=[
                pl.BlockSpec((tb, LANE), lambda i: (i, 0)),    # x: tiled over batch
                pl.BlockSpec((LANE, LANE), lambda i: (0, 0)),  # W^T: resident
                pl.BlockSpec((1, LANE), lambda i: (0, 0)),     # bias: resident
            ],
            out_specs=pl.BlockSpec((tb, LANE), lambda i: (i, 0)),
        ),
        compiler_params=pltpu.CompilerParams(
            # Batch steps are independent -> shardable across v7x's 2 TCs;
            # neutral on v5e/v6e.
            dimension_semantics=("parallel",),
        ),
    )(xp, wt_pad, b_pad)

    return out[:B, :OUT_FEATURES]


if __name__ == "__main__":
    key = jax.random.PRNGKey(0)
    k_x, k_w, k_b = jax.random.split(key, 3)

    batch = 8
    # Deterministic parameter init (mimics nn.Linear's uniform(-1/sqrt(fan_in), ...)).
    bound = 1.0 / (IN_FEATURES ** 0.5)
    w = jax.random.uniform(k_w, (OUT_FEATURES, IN_FEATURES),
                           minval=-bound, maxval=bound, dtype=jnp.float32)
    b = jax.random.uniform(k_b, (OUT_FEATURES,),
                           minval=-bound, maxval=bound, dtype=jnp.float32)
    x = jax.random.normal(k_x, (batch, IN_FEATURES), dtype=jnp.float32)

    # Hoisted out of the call path: transpose + pad once.
    wt_pad, b_pad = prepare_params(w, b)

    y = net_forward(x, wt_pad, b_pad)
    jax.block_until_ready(y)

    # Sanity check against plain JAX reference.
    y_ref = x @ w.T + b
    assert y.shape == (batch, OUT_FEATURES)
    assert jnp.allclose(y, y_ref, atol=1e-5, rtol=1e-5)

    print("KERNEL_OK")
</pallas_src>

<mosaic_0001>
module attributes {stable_mosaic.version = 11 : i64} {
  func.func @linear_kernel(%arg0: i32, %arg1: memref<8x128xf32, #tpu.memory_space<vmem>>, %arg2: memref<128x128xf32, #tpu.memory_space<vmem>>, %arg3: memref<1x128xf32, #tpu.memory_space<vmem>>, %arg4: memref<8x128xf32, #tpu.memory_space<vmem>>) attributes {dimension_semantics = [#tpu.dimension_semantics<parallel>], iteration_bounds = array<i64: 1>, scalar_prefetch = 0 : i64, scratch_operands = 0 : i64, tpu.core_type = #tpu.core_type<tc>, window_params = [{transform_indices = @transform_0, window_bounds = array<i64: 8, 128>}, {pipeline_mode = #tpu.pipeline_mode<synchronous>, transform_indices = @transform_1, window_bounds = array<i64: 128, 128>}, {pipeline_mode = #tpu.pipeline_mode<synchronous>, transform_indices = @transform_2, window_bounds = array<i64: 1, 128>}, {transform_indices = @transform_3, window_bounds = array<i64: 8, 128>}]} {
    %c0 = arith.constant 0 : index
    %c0_0 = arith.constant 0 : index
    %0 = vector.load %arg1[%c0, %c0_0] : memref<8x128xf32, #tpu.memory_space<vmem>>, vector<8x128xf32>
    %c0_1 = arith.constant 0 : index
    %c0_2 = arith.constant 0 : index
    %1 = vector.load %arg2[%c0_1, %c0_2] : memref<128x128xf32, #tpu.memory_space<vmem>>, vector<128x128xf32>
    %cst = arith.constant dense<0.000000e+00> : vector<8x128xf32>
    %2 = tpu.matmul %0, %1, %cst {dimension_numbers = #tpu.dot_dimension_numbers<[1], [0], [0], [1], [0, 0, 1, 1], [], []>} : vector<8x128xf32>, vector<128x128xf32>, vector<8x128xf32> -> vector<8x128xf32>
    %c0_3 = arith.constant 0 : index
    %c0_4 = arith.constant 0 : index
    %3 = vector.load %arg3[%c0_3, %c0_4] : memref<1x128xf32, #tpu.memory_space<vmem>>, vector<1x128xf32>
    %4 = vector.broadcast %3 : vector<1x128xf32> to vector<8x128xf32>
    %5 = arith.addf %2, %4 : vector<8x128xf32>
    %c0_5 = arith.constant 0 : index
    %c0_6 = arith.constant 0 : index
    %6 = vector.load %arg4[%c0_5, %c0_6] : memref<8x128xf32, #tpu.memory_space<vmem>>, vector<8x128xf32>
    tpu.vector_store %arg4[%c0_5, %c0_6], %5 {strides = array<i32>} : memref<8x128xf32, #tpu.memory_space<vmem>>, vector<8x128xf32>,
    return
  }
  func.func @transform_0(%arg0: i32) -> (i32, i32) {
    %c0_i32 = arith.constant 0 : i32
    %c0_i32_0 = arith.constant 0 : i32
    return %arg0, %c0_i32 : i32, i32
  }
  func.func @transform_1(%arg0: i32) -> (i32, i32) {
    %c0_i32 = arith.constant 0 : i32
    %c0_i32_0 = arith.constant 0 : i32
    %c0_i32_1 = arith.constant 0 : i32
    return %c0_i32, %c0_i32_0 : i32, i32
  }
  func.func @transform_2(%arg0: i32) -> (i32, i32) {
    %c0_i32 = arith.constant 0 : i32
    %c0_i32_0 = arith.constant 0 : i32
    %c0_i32_1 = arith.constant 0 : i32
    return %c0_i32, %c0_i32_0 : i32, i32
  }
  func.func @transform_3(%arg0: i32) -> (i32, i32) {
    %c0_i32 = arith.constant 0 : i32
    %c0_i32_0 = arith.constant 0 : i32
    return %arg0, %c0_i32 : i32, i32
  }
}

</mosaic_0001>

<llo_original>
// kernel: net_forward.1
$region0: #{net_forward.1}
  #allocation0 [shape = 'u32[]', space=smem, size = 0x4, offset = 0x4, fixed_abs, tag = 'smem constant byte address 0x4 - core index']
  #allocation1 [shape = 'u32[144,128]{1,0:T(1,128)}', space=vmem, size = 0x12000, scoped, tag = 'internal scratch']
  %s0 = inlined_call_operand.vmem [shape: f32[8,128], index: 0, kind: input, shape index: {}]
  %s1 = inlined_call_operand.hbm [shape: f32[128,128], index: 1, kind: input, shape index: {}]
  %s2 = inlined_call_operand.vmem [shape: f32[1,128], index: 2, kind: input, shape index: {}]
  %s3 = inlined_call_operand.hbm [shape: f32[8,128], index: 3, kind: output, shape index: {}]
  %s4 = sld [smem:[#allocation0]]
  $region26: #{net_forward.1} parent=0
    _
  %s6 = ssub.s32 1, %s4
  %s7 = scalar_select 0, %s6, %s4
  $region1: #{net_forward.1} parent=0
    #allocation2 [shape = 'u8[65536]{0}', space=vmem, size = 0x10000, scoped, tag = 'input window, operand 1, single buffered']
    #allocation3 [shape = 's32[1]{0}', space=sflag, size = 0x4, scoped, tag = 'scoped memory for net_forward.1']
    #allocation4 [shape = 's32[1]{0}', space=sflag, size = 0x4, scoped, tag = 'scoped memory for net_forward.1']
    #allocation5 [shape = 'u8[4096]{0}', space=vmem, size = 0x1000, scoped, tag = 'output window, operand 0, single buffered']
    %8 = vsyncpa [#allocation3], 0
    %9 = vsyncpa [#allocation4], 0
    // Predicated region
    $region2: #{net_forward.1} parent=1 // pred_check
      _
    $region3: #{net_forward.1} parent=1 // pred_check_branch
      %11 = sbr.rel (0) target = $region5
    $region4: #{net_forward.1} parent=1 // pred_region
      _
    $region5: #{net_forward.1} parent=1 // pred_fallthru
      _
    // Predicated region
    $region6: #{net_forward.1} parent=1 // pred_check
      _
    $region7: #{net_forward.1} parent=1 // pred_check_branch
      %13 = sbr.rel (0) target = $region9
    $region8: #{net_forward.1} parent=1 // pred_region
      %s15 = ssub.s32 2048, 2048
      %16 = vsyncadd [#allocation3], %s15
      %s17 = sshll.u32 [#allocation2], 4
      %s18 = int_to_ptr.vmem [resolvable:$true] %s17
      %23 = dma.hbm_to_vmem [thread:$0]  %s1, 2048, %s18, [#allocation3], 128, 128, 8
    $region9: #{net_forward.1} parent=1 // pred_fallthru
      _
    // Predicated region
    $region10: #{net_forward.1} parent=1 // pred_check
      _
    $region11: #{net_forward.1} parent=1 // pred_check_branch
      %25 = sbr.rel (0) target = $region13
    $region12: #{net_forward.1} parent=1 // pred_region
      _
    $region13: #{net_forward.1} parent=1 // pred_fallthru
      _
    // Predicated region
    $region14: #{net_forward.1} parent=1 // pred_check
      _
    $region15: #{net_forward.1} parent=1 // pred_check_branch
      %27 = sbr.rel (0) target = $region17
    $region16: #{net_forward.1} parent=1 // pred_region
      %28 = dma.done [#allocation3], 2048
    $region17: #{net_forward.1} parent=1 // pred_fallthru
      _
    %v29 = vld [vmem:[%s0] sm:$0xff]
    %v30 = vld [vmem:[#allocation2] sm:$0xff]
    %v31 = vld [vmem:[#allocation2 + $0x8] sm:$0xff]
    %v32 = vld [vmem:[#allocation2 + $0x10] sm:$0xff]
    %v33 = vld [vmem:[#allocation2 + $0x18] sm:$0xff]
    %v34 = vld [vmem:[#allocation2 + $0x20] sm:$0xff]
    %v35 = vld [vmem:[#allocation2 + $0x28] sm:$0xff]
    %v36 = vld [vmem:[#allocation2 + $0x30] sm:$0xff]
    %v37 = vld [vmem:[#allocation2 + $0x38] sm:$0xff]
    %v38 = vld [vmem:[#allocation2 + $0x40] sm:$0xff]
    %v39 = vld [vmem:[#allocation2 + $0x48] sm:$0xff]
    %v40 = vld [vmem:[#allocation2 + $0x50] sm:$0xff]
    %v41 = vld [vmem:[#allocation2 + $0x58] sm:$0xff]
    %v42 = vld [vmem:[#allocation2 + $0x60] sm:$0xff]
    %v43 = vld [vmem:[#allocation2 + $0x68] sm:$0xff]
    %v44 = vld [vmem:[#allocation2 + $0x70] sm:$0xff]
    %v45 = vld [vmem:[#allocation2 + $0x78] sm:$0xff]
    %v46 = vld [vmem:[%s2] sm:$0x1]
    %v48 = vlaneseq
    %v49 = vshrl.u32 %v48, 7
    %v50 = vsub.s32 0, %v49
    %v51 = vrot.slane %v46, %v50
    %53 = vmatprep.subr.mxu0 0.0
    %54 = vmatpush1.msra.mxu0 %v30
    %55 = vmatprep.subr.mxu0 0.0
    %56 = vmatpush1.msra.mxu0 %v31
    %57 = vmatprep.subr.mxu0 0.0
    %58 = vmatpush1.msra.mxu0 %v32
    %59 = vmatprep.subr.mxu0 0.0
    %60 = vmatpush1.msra.mxu0 %v33
    %61 = vmatprep.subr.mxu0 0.0
    %62 = vmatpush1.msra.mxu0 %v34
    %63 = vmatprep.subr.mxu0 0.0
    %64 = vmatpush1.msra.mxu0 %v35
    %65 = vmatprep.subr.mxu0 0.0
    %66 = vmatpush1.msra.mxu0 %v36
    %67 = vmatprep.subr.mxu0 0.0
    %68 = vmatpush1.msra.mxu0 %v37
    %69 = vmatprep.subr.mxu0 0.0
    %70 = vmatpush1.msra.mxu0 %v38
    %71 = vmatprep.subr.mxu0 0.0
    %72 = vmatpush1.msra.mxu0 %v39
    %73 = vmatprep.subr.mxu0 0.0
    %74 = vmatpush1.msra.mxu0 %v40
    %75 = vmatprep.subr.mxu0 0.0
    %76 = vmatpush1.msra.mxu0 %v41
    %77 = vmatprep.subr.mxu0 0.0
    %78 = vmatpush1.msra.mxu0 %v42
    %79 = vmatprep.subr.mxu0 0.0
    %80 = vmatpush1.msra.mxu0 %v43
    %81 = vmatprep.subr.mxu0 0.0
    %82 = vmatpush1.msra.mxu0 %v44
    %83 = vmatprep.subr.mxu0 0.0
    %84 = vmatpush1.msra.mxu0 %v45
    %85 = vmatprep.subr.mxu0 0.0
    %86 = vmatpush1.msra.mxu0 0.0
    %87 = vmatprep.subr.mxu0 0.0
    %88 = vmatpush1.msra.mxu0 0.0
    %89 = vmatprep.subr.mxu0 0.0
    %90 = vmatpush1.msra.mxu0 0.0
    %91 = vmatprep.subr.mxu0 0.0
    %92 = vmatpush1.msra.mxu0 0.0
    %93 = vmatprep.subr.mxu0 0.0
    %94 = vmatpush1.msra.mxu0 0.0
    %95 = vmatprep.subr.mxu0 0.0
    %96 = vmatpush1.msra.mxu0 0.0
    %97 = vmatprep.subr.mxu0 0.0
    %98 = vmatpush1.msra.mxu0 0.0
    %99 = vmatprep.subr.mxu0 0.0
    %100 = vmatpush1.msra.mxu0 0.0
    %101 = vmatprep.subr.mxu0 0.0
    %102 = vmatpush1.msra.mxu0 0.0
    %103 = vmatprep.subr.mxu0 0.0
    %104 = vmatpush1.msra.mxu0 0.0
    %105 = vmatprep.subr.mxu0 0.0
    %106 = vmatpush1.msra.mxu0 0.0
    %107 = vmatprep.subr.mxu0 0.0
    %108 = vmatpush1.msra.mxu0 0.0
    %109 = vmatprep.subr.mxu0 0.0
    %110 = vmatpush1.msra.mxu0 0.0
    %111 = vmatprep.subr.mxu0 0.0
    %112 = vmatpush1.msra.mxu0 0.0
    %113 = vmatprep.subr.mxu0 0.0
    %114 = vmatpush1.msra.mxu0 0.0
    %115 = vmatprep.subr.mxu0 0.0
    %116 = vmatpush1.msra.mxu0 0.0
    %117 = vmatprep.mubr.f32.mxu0 0.0
    %118 = vmatmul.mubr.f32.gmra.mrb[0].mxu0 %v29
    %v119 = vpop.f32.mrb[0].mxu0
    %v120 = vadd.f32 %v51, %v119
    %v121 = vpop.f32.mrb[0].mxu0
    %122 = vdwg.mxu0
    %123 = vst [vmem:[#allocation5] sm:$0xff] %v120
    // Predicated region
    $region18: #{net_forward.1} parent=1 // pred_check
      _
    $region19: #{net_forward.1} parent=1 // pred_check_branch
      %125 = sbr.rel (0) target = $region21
    $region20: #{net_forward.1} parent=1 // pred_region
      %s127 = ssub.s32 128, 128
      %128 = vsyncadd [#allocation4], %s127
      %s130 = sshll.u32 [#allocation5], 4
      %s131 = int_to_ptr.vmem [resolvable:$true] %s130
      %133 = dma.vmem_to_hbm [thread:$0]  %s131, 128, %s3, [#allocation4]
    $region21: #{net_forward.1} parent=1 // pred_fallthru
      _
    // Predicated region
    $region22: #{net_forward.1} parent=1 // pred_check
      _
    $region23: #{net_forward.1} parent=1 // pred_check_branch
      %135 = sbr.rel (0) target = $region25
    $region24: #{net_forward.1} parent=1 // pred_region
      %136 = dma.done [#allocation4], 128
    $region25: #{net_forward.1} parent=1 // pred_fallthru
      _
    %137 = vsyncpa [#allocation3], 1
    %138 = vsyncpa [#allocation4], 1

</llo_original>
